<compile_context>
chip_gen: v7x
topology: tpu7x:2x2x1
jax: 0.10.0
libtpu: 0.0.40
codegen_flags: <defaults>
</compile_context>

<pallas_src>
import functools

import jax
import jax.numpy as jnp
from jax.experimental import pallas as pl
from jax.experimental.pallas import tpu as pltpu


_MIN_GRID_STEPS = 4                    # >= 2 per TensorCore on v7x + pipelining
_VMEM_BUDGET = 16 * 1024 * 1024        # per-step buffer budget (fits v5e default)
_VMEM_LIMIT = 32 * 1024 * 1024         # safe on v5e/v6e (128 MiB) and v7x (64 MiB)


def _round_up(x, m):
    return ((x + m - 1) // m) * m


def _cdiv(a, b):
    return (a + b - 1) // b


def _patch_embed_kernel(x_ref, w_ref, b_ref, o_ref):
    # x_ref: (tm, K_pad) patch rows, w_ref: (K_pad, E_pad), b_ref: (1, E_pad) f32
    acc = jnp.dot(x_ref[...], w_ref[...], preferred_element_type=jnp.float32)
    o_ref[...] = (acc + b_ref[...]).astype(o_ref.dtype)


def prepare_projection(conv_w):
    """Conv2d weight (E, C, Ph, Pw) -> matmul layout (K, E). Do this once."""
    E = conv_w.shape[0]
    return conv_w.reshape(E, -1).T


def patch_embed_matmul(patches, weight, bias, *, tm_max=512,
                       compute_dtype=jnp.bfloat16, out_dtype=None):
    """patches: (M, K), weight: (K, E), bias: (E,) -> (M, E)."""
    M, K = patches.shape
    Kw, E = weight.shape
    assert Kw == K
    out_dtype = out_dtype if out_dtype is not None else patches.dtype

    # Reduced-precision inputs for the MXU (bf16 by default); f32 accumulation.
    if compute_dtype is not None and patches.dtype != compute_dtype:
        patches = patches.astype(compute_dtype)
    if compute_dtype is not None and weight.dtype != compute_dtype:
        weight = weight.astype(compute_dtype)

    in_item = jnp.dtype(patches.dtype).itemsize
    out_item = jnp.dtype(out_dtype).itemsize

    # Lane-dense contraction and output: pad K and E up to multiples of 128.
    # Zero padding is mathematically inert; E padding is sliced off afterwards.
    K_pad = _round_up(K, 128)
    if K_pad != K:
        patches = jnp.pad(patches, ((0, 0), (0, K_pad - K)))
        weight = jnp.pad(weight, ((0, K_pad - K), (0, 0)))
    E_pad = _round_up(E, 128)
    if E_pad != E:
        weight = jnp.pad(weight, ((0, 0), (0, E_pad - E)))
        bias = jnp.pad(bias, ((0, E_pad - E),))
    bias2d = bias.reshape(1, E_pad).astype(jnp.float32)

    # VMEM-aware cap on tm: double-buffered x/out tiles + resident weight/bias
    # must fit the per-step budget (keeps v5e's 16 MiB default & v7x's 32 MiB
    # scoped VMEM happy even for ViT-H-sized K/E).
    fixed = 2 * (K_pad * E_pad * in_item + E_pad * 4)
    per_row = 2 * (K_pad * in_item + E_pad * out_item)
    avail = _VMEM_BUDGET - fixed
    tm_budget = max(8, (avail // per_row) // 8 * 8) if avail > 8 * per_row else 8
    tm_cap = max(8, min(tm_max, tm_budget))

    # Minimal-padding tile selection with enough grid steps for megacore/pipeline.
    n_tiles = min(max(_cdiv(M, tm_cap), _MIN_GRID_STEPS), _cdiv(M, 8))
    n_tiles = max(n_tiles, 1)
    tm = _round_up(_cdiv(M, n_tiles), 8)
    M_pad = n_tiles * tm
    if M_pad != M:
        patches = jnp.pad(patches, ((0, M_pad - M), (0, 0)))

    grid = (n_tiles,)

    bytes_accessed = (
        M_pad * K_pad * in_item          # patch rows in
        + K_pad * E_pad * in_item        # weight in (resident)
        + E_pad * 4                      # bias in
        + M_pad * E_pad * out_item)      # output out

    out = pl.pallas_call(
        _patch_embed_kernel,
        out_shape=jax.ShapeDtypeStruct((M_pad, E_pad), out_dtype),
        grid_spec=pltpu.PrefetchScalarGridSpec(
            num_scalar_prefetch=0,
            grid=grid,
            in_specs=[
                pl.BlockSpec((tm, K_pad), lambda i: (i, 0)),
                # Grid-invariant weight / bias: constant index_map keeps them
                # resident in VMEM across all M tiles (no per-step re-fetch).
                pl.BlockSpec((K_pad, E_pad), lambda i: (0, 0)),
                pl.BlockSpec((1, E_pad), lambda i: (0, 0)),
            ],
            out_specs=pl.BlockSpec((tm, E_pad), lambda i: (i, 0)),
        ),
        compiler_params=pltpu.CompilerParams(
            dimension_semantics=("parallel",),
            vmem_limit_bytes=_VMEM_LIMIT),
        cost_estimate=pl.CostEstimate(
            flops=2 * M_pad * K_pad * E_pad,
            transcendentals=0,
            bytes_accessed=bytes_accessed),
    )(patches, weight, bias2d)

    # Strip padding only when it was added (avoids a no-op output copy).
    if M_pad != M or E_pad != E:
        out = out[:M, :E]
    return out


def patch_embed_forward(x, w_mat, conv_b, patch_size, *,
                        compute_dtype=jnp.bfloat16, out_dtype=None, tm_max=512):
    """x: (B, C, H, W) NCHW. w_mat: (C*Ph*Pw, E) from prepare_projection.

    Returns (B, Np, E) == conv(x).flatten(2).permute(0, 2, 1).
    """
    B, C, H, W = x.shape
    E = w_mat.shape[1]
    Ph, Pw = patch_size
    Hp, Wp = H // Ph, W // Pw
    # TODO(synk): fold this patch-extraction transpose into the kernel (needs
    # Ph % 8 == 0 for a (1, C, Ph, W) x-block); currently one XLA copy of x.
    patches = x.reshape(B, C, Hp, Ph, Wp, Pw).transpose(0, 2, 4, 1, 3, 5)
    patches = patches.reshape(B * Hp * Wp, C * Ph * Pw)
    out = patch_embed_matmul(
        patches, w_mat, conv_b, tm_max=tm_max, compute_dtype=compute_dtype,
        out_dtype=out_dtype if out_dtype is not None else x.dtype)
    return out.reshape(B, Hp * Wp, E)


if __name__ == "__main__":
    # Small shapes consistent with the module: img=16, patch=4, in_chans=4, embed=32
    B, C, H, W = 2, 4, 16, 16
    P = 4
    E = 32

    key = jax.random.PRNGKey(0)
    kx, kw, kb = jax.random.split(key, 3)
    x = jax.random.normal(kx, (B, C, H, W), dtype=jnp.float32)
    # Conv2d(C, E, kernel=P, stride=P) parameter shapes.
    conv_w = jax.random.normal(kw, (E, C, P, P), dtype=jnp.float32) * 0.05
    conv_b = jax.random.normal(kb, (E,), dtype=jnp.float32) * 0.05

    # Store the projection in matmul layout once (no per-call transpose).
    w_mat = prepare_projection(conv_w)

    fwd_bf16 = jax.jit(functools.partial(patch_embed_forward, patch_size=(P, P)))
    fwd_f32 = jax.jit(functools.partial(patch_embed_forward, patch_size=(P, P),
                                        compute_dtype=None))

    # Reference: strided conv via lax, then flatten(2).permute(0,2,1)
    ref_conv = jax.lax.conv_general_dilated(
        x, conv_w, window_strides=(P, P), padding="VALID",
        dimension_numbers=("NCHW", "OIHW", "NCHW"))
    ref_conv = ref_conv + conv_b.reshape(1, E, 1, 1)
    ref = ref_conv.reshape(B, E, -1).transpose(0, 2, 1)

    # Exact f32 compute path (tight tolerance).
    out_f32 = jax.block_until_ready(fwd_f32(x, w_mat, conv_b))
    assert out_f32.shape == (B, (H // P) * (W // P), E), out_f32.shape
    assert jnp.allclose(out_f32, ref, atol=1e-4, rtol=1e-4), float(
        jnp.max(jnp.abs(out_f32 - ref)))

    # Default bf16 compute path (f32 accumulation, looser tolerance).
    out = jax.block_until_ready(fwd_bf16(x, w_mat, conv_b))
    assert out.shape == out_f32.shape
    assert jnp.allclose(out, ref, atol=5e-2, rtol=5e-2), float(
        jnp.max(jnp.abs(out - ref)))

    print("KERNEL_OK")
</pallas_src>

<mosaic_0001>
module attributes {stable_mosaic.version = 11 : i64} {
  func.func @_patch_embed_kernel(%arg0: i32, %arg1: memref<8x128xf32, #tpu.memory_space<vmem>>, %arg2: memref<128x128xf32, #tpu.memory_space<vmem>>, %arg3: memref<1x128xf32, #tpu.memory_space<vmem>>, %arg4: memref<8x128xf32, #tpu.memory_space<vmem>>) attributes {dimension_semantics = [#tpu.dimension_semantics<parallel>], iteration_bounds = array<i64: 4>, scalar_prefetch = 0 : i64, scratch_operands = 0 : i64, tpu.core_type = #tpu.core_type<tc>, window_params = [{transform_indices = @transform_0, window_bounds = array<i64: 8, 128>}, {pipeline_mode = #tpu.pipeline_mode<synchronous>, transform_indices = @transform_1, window_bounds = array<i64: 128, 128>}, {pipeline_mode = #tpu.pipeline_mode<synchronous>, transform_indices = @transform_2, window_bounds = array<i64: 1, 128>}, {transform_indices = @transform_3, window_bounds = array<i64: 8, 128>}]} {
    %c0 = arith.constant 0 : index
    %c0_0 = arith.constant 0 : index
    %0 = vector.load %arg1[%c0, %c0_0] : memref<8x128xf32, #tpu.memory_space<vmem>>, vector<8x128xf32>
    %c0_1 = arith.constant 0 : index
    %c0_2 = arith.constant 0 : index
    %1 = vector.load %arg2[%c0_1, %c0_2] : memref<128x128xf32, #tpu.memory_space<vmem>>, vector<128x128xf32>
    %cst = arith.constant dense<0.000000e+00> : vector<8x128xf32>
    %2 = tpu.matmul %0, %1, %cst {dimension_numbers = #tpu.dot_dimension_numbers<[1], [0], [0], [1], [0, 0, 1, 1], [], []>} : vector<8x128xf32>, vector<128x128xf32>, vector<8x128xf32> -> vector<8x128xf32>
    %c0_3 = arith.constant 0 : index
    %c0_4 = arith.constant 0 : index
    %3 = vector.load %arg3[%c0_3, %c0_4] : memref<1x128xf32, #tpu.memory_space<vmem>>, vector<1x128xf32>
    %4 = vector.broadcast %3 : vector<1x128xf32> to vector<8x128xf32>
    %5 = arith.addf %2, %4 : vector<8x128xf32>
    %c0_5 = arith.constant 0 : index
    %c0_6 = arith.constant 0 : index
    %6 = vector.load %arg4[%c0_5, %c0_6] : memref<8x128xf32, #tpu.memory_space<vmem>>, vector<8x128xf32>
    tpu.vector_store %arg4[%c0_5, %c0_6], %5 {strides = array<i32>} : memref<8x128xf32, #tpu.memory_space<vmem>>, vector<8x128xf32>,
    return
  }
  func.func @transform_0(%arg0: i32) -> (i32, i32) {
    %c0_i32 = arith.constant 0 : i32
    %c0_i32_0 = arith.constant 0 : i32
    return %arg0, %c0_i32 : i32, i32
  }
  func.func @transform_1(%arg0: i32) -> (i32, i32) {
    %c0_i32 = arith.constant 0 : i32
    %c0_i32_0 = arith.constant 0 : i32
    %c0_i32_1 = arith.constant 0 : i32
    return %c0_i32, %c0_i32_0 : i32, i32
  }
  func.func @transform_2(%arg0: i32) -> (i32, i32) {
    %c0_i32 = arith.constant 0 : i32
    %c0_i32_0 = arith.constant 0 : i32
    %c0_i32_1 = arith.constant 0 : i32
    return %c0_i32, %c0_i32_0 : i32, i32
  }
  func.func @transform_3(%arg0: i32) -> (i32, i32) {
    %c0_i32 = arith.constant 0 : i32
    %c0_i32_0 = arith.constant 0 : i32
    return %arg0, %c0_i32 : i32, i32
  }
}

</mosaic_0001>

<llo_original>
// kernel: patch_embed_forward.1
$region0: #{patch_embed_forward.1}
  #allocation0 [shape = 'u32[]', space=smem, size = 0x4, offset = 0x4, fixed_abs, tag = 'smem constant byte address 0x4 - core index']
  #allocation1 [shape = 'u32[144,128]{1,0:T(1,128)}', space=vmem, size = 0x12000, scoped, tag = 'internal scratch']
  %s0 = inlined_call_operand.vmem [shape: f32[32,128], index: 0, kind: input, shape index: {}]
  %s1 = inlined_call_operand.vmem [shape: f32[128,128], index: 1, kind: input, shape index: {}]
  %s2 = inlined_call_operand.vmem [shape: f32[1,128], index: 2, kind: input, shape index: {}]
  %s3 = inlined_call_operand.hbm [shape: f32[32,128], index: 3, kind: output, shape index: {}]
  %s4 = sld [smem:[#allocation0]]
  $region45: #{patch_embed_forward.1} parent=0
    _
  %s6 = ssub.s32 1, %s4
  %s7 = scalar_select 0, %s6, %s4
  $region1: #{patch_embed_forward.1} parent=0
    #allocation2 [shape = 'u8[8192]{0}', space=vmem, size = 0x2000, scoped, tag = 'output window, operand 0']
    #allocation3 [shape = 's32[2]{0}', space=sflag, size = 0x8, scoped, tag = 'scoped memory for patch_embed_forward.1']
    %8 = vsyncpa [#allocation3], 0
    %s9 = scalar_lea.sflag [#allocation3], 1
    %10 = vsyncpa %s9, 0
    loop: start=0, step=1, limit=6
    $region2: #{patch_embed_forward.1} parent=1 // loop_pre_header
      _
    $region3: #{patch_embed_forward.1} parent=1 // loop_header
      %s12 = sphi 0, %s16
      %p13 = scmp.ge.s32.totalorder %s12, 6
      %s22 = sphi 0, %s24
      %s25 = sphi 0, %s22
      %s26 = sphi 0, %s25
      %s42 = sphi 0, %s26
      %s46 = sphi 0, %s46
      %s48 = sphi 0, %s46
      %s49 = sphi 0, %s48
      %s63 = sphi 0, %s49
      %s67 = sphi 0, %s67
      %s69 = sphi 0, %s67
      %s70 = sphi 0, %s69
      %s84 = sphi 0, %s70
      %s90 = sphi 0, %s92
      %s93 = sphi 0, %s90
      %s94 = sphi 0, %s93
      %s110 = sphi 0, %s94
    $region4: #{patch_embed_forward.1} parent=1 // loop_header_branch
      %15 = sbr.rel (%p13) target = $region8
    $region5: #{patch_embed_forward.1} parent=1 // loop_body
      %s17 = ssub.s32 %s12, 1
      %s18 = ssub.s32 %s12, 2
      %s19 = sadd.s32 %s12, 1
      %s20 = ssub.s32 %s12, %s19
      %p21 = scmp.eq.s32.totalorder %s20, 0
      %s23 = sadd.s32 %s22, 1
      %s24 = scalar_select %p21, %s22, %s23
      %p27 = pneg %p21
      %p28 = scmp.eq.s32.totalorder %s12, 3
      %p29 = por %p27, %p28
      %p30 = scmp.ne.s32.totalorder %s22, %s25
      %p31 = scmp.eq.s32.totalorder %s12, 0
      %p32 = por %p30, %p31
      %p33 = scmp.ne.s32.totalorder %s22, %s25
      %p34 = scmp.eq.s32.totalorder %s17, 3
      %p35 = por %p33, %p34
      %p36 = scmp.ne.s32.totalorder %s25, %s26
      %p37 = scmp.eq.s32.totalorder %s17, 0
      %p38 = por %p36, %p37
      %p39 = scmp.ne.s32.totalorder %s25, %s26
      %p40 = scmp.eq.s32.totalorder %s18, 3
      %p41 = por %p39, %p40
      %p43 = scmp.ne.s32.totalorder %s26, %s42
      %p44 = scmp.eq.s32.totalorder %s18, 0
      %p45 = por %p43, %p44
      %s47 = sadd.s32 %s46, 1
      %p50 = scmp.eq.s32.totalorder %s12, 3
      %p51 = scmp.ne.s32.totalorder %s46, %s48
      %p52 = scmp.eq.s32.totalorder %s12, 0
      %p53 = por %p51, %p52
      %p54 = scmp.ne.s32.totalorder %s46, %s48
      %p55 = scmp.eq.s32.totalorder %s17, 3
      %p56 = por %p54, %p55
      %p57 = scmp.ne.s32.totalorder %s48, %s49
      %p58 = scmp.eq.s32.totalorder %s17, 0
      %p59 = por %p57, %p58
      %p60 = scmp.ne.s32.totalorder %s48, %s49
      %p61 = scmp.eq.s32.totalorder %s18, 3
      %p62 = por %p60, %p61
      %p64 = scmp.ne.s32.totalorder %s49, %s63
      %p65 = scmp.eq.s32.totalorder %s18, 0
      %p66 = por %p64, %p65
      %s68 = sadd.s32 %s67, 1
      %p71 = scmp.eq.s32.totalorder %s12, 3
      %p72 = scmp.ne.s32.totalorder %s67, %s69
      %p73 = scmp.eq.s32.totalorder %s12, 0
      %p74 = por %p72, %p73
      %p75 = scmp.ne.s32.totalorder %s67, %s69
      %p76 = scmp.eq.s32.totalorder %s17, 3
      %p77 = por %p75, %p76
      %p78 = scmp.ne.s32.totalorder %s69, %s70
      %p79 = scmp.eq.s32.totalorder %s17, 0
      %p80 = por %p78, %p79
      %p81 = scmp.ne.s32.totalorder %s69, %s70
      %p82 = scmp.eq.s32.totalorder %s18, 3
      %p83 = por %p81, %p82
      %p85 = scmp.ne.s32.totalorder %s70, %s84
      %p86 = scmp.eq.s32.totalorder %s18, 0
      %p87 = por %p85, %p86
      %s88 = ssub.s32 %s12, %s19
      %p89 = scmp.eq.s32.totalorder %s88, 0
      %s91 = sadd.s32 %s90, 1
      %s92 = scalar_select %p89, %s90, %s91
      %p95 = pneg %p89
      %p96 = scmp.eq.s32.totalorder %s12, 3
      %p97 = por %p95, %p96
      %p98 = scmp.ne.s32.totalorder %s90, %s93
      %p99 = scmp.eq.s32.totalorder %s12, 0
      %p100 = por %p98, %p99
      %p101 = scmp.ne.s32.totalorder %s90, %s93
      %p102 = scmp.eq.s32.totalorder %s17, 3
      %p103 = por %p101, %p102
      %p104 = scmp.ne.s32.totalorder %s93, %s94
      %p105 = scmp.eq.s32.totalorder %s17, 0
      %p106 = por %p104, %p105
      %p107 = scmp.ne.s32.totalorder %s93, %s94
      %p108 = scmp.eq.s32.totalorder %s18, 3
      %p109 = por %p107, %p108
      %p111 = scmp.ne.s32.totalorder %s94, %s110
      %p112 = scmp.eq.s32.totalorder %s18, 0
      %p113 = por %p111, %p112
      %p114 = scmp.le.s32.totalorder 1, %s12
      %p115 = scmp.lt.s32.totalorder %s12, 5
      %p116 = pnand %p114, %p115
      %p117 = pneg %p116
      // Predicated region
      $region9: #{patch_embed_forward.1} parent=5 // pred_check
        _
      $region10: #{patch_embed_forward.1} parent=5 // pred_check_branch
        %119 = sbr.rel (%p116) target = $region12
      $region11: #{patch_embed_forward.1} parent=5 // pred_region
        %s120 = ssub.s32 %s12, 1
        // Predicated region
        $region13: #{patch_embed_forward.1} parent=11 // pred_check
          %p121 = pneg %p59
        $region14: #{patch_embed_forward.1} parent=11 // pred_check_branch
          %123 = sbr.rel (%p121) target = $region16
        $region15: #{patch_embed_forward.1} parent=11 // pred_region
          _
        $region16: #{patch_embed_forward.1} parent=11 // pred_fallthru
          _
        // Predicated region
        $region17: #{patch_embed_forward.1} parent=11 // pred_check
          %p124 = pneg %p80
        $region18: #{patch_embed_forward.1} parent=11 // pred_check_branch
          %126 = sbr.rel (%p124) target = $region20
        $region19: #{patch_embed_forward.1} parent=11 // pred_region
          _
        $region20: #{patch_embed_forward.1} parent=11 // pred_fallthru
          _
      $region12: #{patch_embed_forward.1} parent=5 // pred_fallthru
        _
      %p127 = scmp.lt.s32.totalorder %s12, 4
      // Predicated region
      $region21: #{patch_embed_forward.1} parent=5 // pred_check
        %p128 = pneg %p127
      $region22: #{patch_embed_forward.1} parent=5 // pred_check_branch
        %130 = sbr.rel (%p128) target = $region24
      $region23: #{patch_embed_forward.1} parent=5 // pred_region
        // Predicated region
        $region25: #{patch_embed_forward.1} parent=23 // pred_check
          %p131 = pneg %p32
        $region26: #{patch_embed_forward.1} parent=23 // pred_check_branch
          %133 = sbr.rel (%p131) target = $region28
        $region27: #{patch_embed_forward.1} parent=23 // pred_region
          %p134 = scmp.lt.s32.totalorder %s12, 3
          %s135 = scalar_select %p134, %s12, 3
          %s136 = smul.addr %s135, 8
          %s137 = scalar_lea.vmem %s0, %s136
        $region28: #{patch_embed_forward.1} parent=23 // pred_fallthru
          _
      $region24: #{patch_embed_forward.1} parent=5 // pred_fallthru
        _
      %p138 = scmp.le.s32.totalorder 1, %s12
      %p139 = scmp.lt.s32.totalorder %s12, 5
      %p140 = pnand %p138, %p139
      %p141 = pneg %p140
      // Predicated region
      $region29: #{patch_embed_forward.1} parent=5 // pred_check
        _
      $region30: #{patch_embed_forward.1} parent=5 // pred_check_branch
        %143 = sbr.rel (%p140) target = $region32
      $region31: #{patch_embed_forward.1} parent=5 // pred_region
        %s144 = ssub.s32 %s12, 1
        %p145 = scmp.lt.s32.totalorder %s17, 3
        %s146 = scalar_select %p145, %s17, 3
        %s147 = smul.addr %s146, 8
        %s148 = scalar_lea.vmem %s0, %s147
        %p149 = pneg %p38
        %p150 = pneg %p35
        %p151 = pneg %p59
        %p152 = pneg %p56
        %p153 = pneg %p80
        %p154 = pneg %p77
        %p155 = pneg %p106
        %p156 = pneg %p103
        %s157 = sand.u32 %s93, 1
        %s158 = scalar_lea.sflag [#allocation3], %s157
        %s159 = sand.u32 %s93, 1
        %s160 = smul.addr %s159, 8
        %s161 = scalar_lea.vmem [#allocation2], %s160
        %p162 = scmp.lt.s32.totalorder %s17, 3
        %s163 = scalar_select %p162, %s17, 3
        %s164 = smul.addr %s163, 8
        %s165 = scalar_lea.vmem %s0, %s164
        %v166 = vld [vmem:[%s165] sm:$0xff]
        %v167 = vld [vmem:[%s1] sm:$0xff]
        %v168 = vld [vmem:[%s1 + $0x8] sm:$0xff]
        %v169 = vld [vmem:[%s1 + $0x10] sm:$0xff]
        %v170 = vld [vmem:[%s1 + $0x18] sm:$0xff]
        %v171 = vld [vmem:[%s1 + $0x20] sm:$0xff]
        %v172 = vld [vmem:[%s1 + $0x28] sm:$0xff]
        %v173 = vld [vmem:[%s1 + $0x30] sm:$0xff]
        %v174 = vld [vmem:[%s1 + $0x38] sm:$0xff]
        %v175 = vld [vmem:[%s1 + $0x40] sm:$0xff]
        %v176 = vld [vmem:[%s1 + $0x48] sm:$0xff]
        %v177 = vld [vmem:[%s1 + $0x50] sm:$0xff]
        %v178 = vld [vmem:[%s1 + $0x58] sm:$0xff]
        %v179 = vld [vmem:[%s1 + $0x60] sm:$0xff]
        %v180 = vld [vmem:[%s1 + $0x68] sm:$0xff]
        %v181 = vld [vmem:[%s1 + $0x70] sm:$0xff]
        %v182 = vld [vmem:[%s1 + $0x78] sm:$0xff]
        %v183 = vld [vmem:[%s2] sm:$0x1]
        %v185 = vlaneseq
        %v186 = vshrl.u32 %v185, 7
        %v187 = vsub.s32 0, %v186
        %v188 = vrot.slane %v183, %v187
        %190 = vmatprep.subr.mxu0 0.0
        %191 = vmatpush1.msra.mxu0 %v167
        %192 = vmatprep.subr.mxu0 0.0
        %193 = vmatpush1.msra.mxu0 %v168
        %194 = vmatprep.subr.mxu0 0.0
        %195 = vmatpush1.msra.mxu0 %v169
        %196 = vmatprep.subr.mxu0 0.0
        %197 = vmatpush1.msra.mxu0 %v170
        %198 = vmatprep.subr.mxu0 0.0
        %199 = vmatpush1.msra.mxu0 %v171
        %200 = vmatprep.subr.mxu0 0.0
        %201 = vmatpush1.msra.mxu0 %v172
        %202 = vmatprep.subr.mxu0 0.0
        %203 = vmatpush1.msra.mxu0 %v173
        %204 = vmatprep.subr.mxu0 0.0
        %205 = vmatpush1.msra.mxu0 %v174
        %206 = vmatprep.subr.mxu0 0.0
        %207 = vmatpush1.msra.mxu0 %v175
        %208 = vmatprep.subr.mxu0 0.0
        %209 = vmatpush1.msra.mxu0 %v176
        %210 = vmatprep.subr.mxu0 0.0
        %211 = vmatpush1.msra.mxu0 %v177
        %212 = vmatprep.subr.mxu0 0.0
        %213 = vmatpush1.msra.mxu0 %v178
        %214 = vmatprep.subr.mxu0 0.0
        %215 = vmatpush1.msra.mxu0 %v179
        %216 = vmatprep.subr.mxu0 0.0
        %217 = vmatpush1.msra.mxu0 %v180
        %218 = vmatprep.subr.mxu0 0.0
        %219 = vmatpush1.msra.mxu0 %v181
        %220 = vmatprep.subr.mxu0 0.0
        %221 = vmatpush1.msra.mxu0 %v182
        %222 = vmatprep.subr.mxu0 0.0
        %223 = vmatpush1.msra.mxu0 0.0
        %224 = vmatprep.subr.mxu0 0.0
        %225 = vmatpush1.msra.mxu0 0.0
        %226 = vmatprep.subr.mxu0 0.0
        %227 = vmatpush1.msra.mxu0 0.0
        %228 = vmatprep.subr.mxu0 0.0
        %229 = vmatpush1.msra.mxu0 0.0
        %230 = vmatprep.subr.mxu0 0.0
        %231 = vmatpush1.msra.mxu0 0.0
        %232 = vmatprep.subr.mxu0 0.0
        %233 = vmatpush1.msra.mxu0 0.0
        %234 = vmatprep.subr.mxu0 0.0
        %235 = vmatpush1.msra.mxu0 0.0
        %236 = vmatprep.subr.mxu0 0.0
        %237 = vmatpush1.msra.mxu0 0.0
        %238 = vmatprep.subr.mxu0 0.0
        %239 = vmatpush1.msra.mxu0 0.0
        %240 = vmatprep.subr.mxu0 0.0
        %241 = vmatpush1.msra.mxu0 0.0
        %242 = vmatprep.subr.mxu0 0.0
        %243 = vmatpush1.msra.mxu0 0.0
        %244 = vmatprep.subr.mxu0 0.0
        %245 = vmatpush1.msra.mxu0 0.0
        %246 = vmatprep.subr.mxu0 0.0
        %247 = vmatpush1.msra.mxu0 0.0
        %248 = vmatprep.subr.mxu0 0.0
        %249 = vmatpush1.msra.mxu0 0.0
        %250 = vmatprep.subr.mxu0 0.0
        %251 = vmatpush1.msra.mxu0 0.0
        %252 = vmatprep.subr.mxu0 0.0
        %253 = vmatpush1.msra.mxu0 0.0
        %254 = vmatprep.mubr.f32.mxu0 0.0
        %255 = vmatmul.mubr.f32.gmra.mrb[0].mxu0 %v166
        %v256 = vpop.f32.mrb[0].mxu0
        %v257 = vadd.f32 %v188, %v256
        %v258 = vpop.f32.mrb[0].mxu0
        %259 = vdwg.mxu0
        %260 = vst [vmem:[%s161] sm:$0xff] %v257
        %s261 = sand.u32 %s93, 1
        %s262 = scalar_lea.sflag [#allocation3], %s261
        %s263 = sand.u32 %s93, 1
        %s264 = smul.addr %s263, 8
        %s265 = scalar_lea.vmem [#allocation2], %s264
        // Predicated region
        $region33: #{patch_embed_forward.1} parent=31 // pred_check
          %p266 = pneg %p103
        $region34: #{patch_embed_forward.1} parent=31 // pred_check_branch
          %268 = sbr.rel (%p266) target = $region36
        $region35: #{patch_embed_forward.1} parent=31 // pred_region
          %s270 = ssub.s32 128, 128
          %271 = vsyncadd %s262, %s270
          %s272 = smul.addr %s17, 128
          %s273 = scalar_lea.hbm %s3, %s272
          %s275 = sshll.u32 %s265, 4
          %s276 = int_to_ptr.vmem [resolvable:$true] %s275
          %278 = dma.vmem_to_hbm [thread:$0]  %s276, 128, %s273, %s262
        $region36: #{patch_embed_forward.1} parent=31 // pred_fallthru
          _
      $region32: #{patch_embed_forward.1} parent=5 // pred_fallthru
        _
      %p279 = scmp.le.s32.totalorder 2, %s12
      // Predicated region
      $region37: #{patch_embed_forward.1} parent=5 // pred_check
        %p280 = pneg %p279
      $region38: #{patch_embed_forward.1} parent=5 // pred_check_branch
        %282 = sbr.rel (%p280) target = $region40
      $region39: #{patch_embed_forward.1} parent=5 // pred_region
        %s283 = ssub.s32 %s12, 2
        // Predicated region
        $region41: #{patch_embed_forward.1} parent=39 // pred_check
          %p284 = pneg %p109
        $region42: #{patch_embed_forward.1} parent=39 // pred_check_branch
          %286 = sbr.rel (%p284) target = $region44
        $region43: #{patch_embed_forward.1} parent=39 // pred_region
          %s287 = sand.u32 %s94, 1
          %s288 = scalar_lea.sflag [#allocation3], %s287
          %s289 = sand.u32 %s94, 1
          %s290 = smul.addr %s289, 8
          %s291 = scalar_lea.vmem [#allocation2], %s290
          %292 = dma.done %s288, 128
        $region44: #{patch_embed_forward.1} parent=39 // pred_fallthru
          _
      $region40: #{patch_embed_forward.1} parent=5 // pred_fallthru
        _
    $region6: #{patch_embed_forward.1} parent=1 // loop_footer
      %s16 = sadd.s32 1, %s12
    $region7: #{patch_embed_forward.1} parent=1 // loop_footer_branch
      %11 = sbr.rel target = $region3
    $region8: #{patch_embed_forward.1} parent=1 // loop_exit
      _
    %293 = vsyncpa [#allocation3], 1
    %s294 = scalar_lea.sflag [#allocation3], 1
    %295 = vsyncpa %s294, 1

</llo_original>
